<compile_context>
chip_gen: v6e
topology: v6e:2x2x1
jax: 0.10.0
libtpu: 0.0.40
codegen_flags: <defaults>
</compile_context>

<pallas_src>
import jax
import jax.numpy as jnp
from jax.experimental import pallas as pl
from jax.experimental.pallas import tpu as pltpu


def decoder_kernel(ids_ref, h_ref, enc_ref, ew_ref, wc_ref, whh_ref, bhh_ref,
                   wout_ref, bout_ref,
                   out_ref, hnew_ref, attw_ref,
                   m_sc, l_sc):
    H = h_ref.shape[-1]
    TN = wout_ref.shape[-1]
    j = pl.program_id(0)

    # ---- first vocab tile: attention + GRU cell (runs once per decode step) ----
    @pl.when(j == 0)
    def _():
        h = h_ref[...]                                      # (1, H) f32
        h_bf = h.astype(jnp.bfloat16)
        enc = enc_ref[...]                                  # (S, H) bf16

        # dot-attention scores: contract last dims of both operands (no transpose).
        scores = jax.lax.dot_general(h_bf, enc, (((1,), (1,)), ((), ())),
                                     preferred_element_type=jnp.float32)      # (1, S)
        m = jnp.max(scores, axis=-1, keepdims=True)
        e = jnp.exp(scores - m)
        attw = e / jnp.sum(e, axis=-1, keepdims=True)       # exact softmax
        attw_ref[...] = attw

        context = jnp.dot(attw.astype(jnp.bfloat16), enc,
                          preferred_element_type=jnp.float32)                 # (1, H)

        # GRU cell, input = [emb, context] (no concat; W_ih split; b_ih already
        # folded into the fetched embedding row).  Gate order r, z, n (PyTorch).
        gi = ew_ref[0].astype(jnp.float32) + jnp.dot(
            context.astype(jnp.bfloat16), wc_ref[...],
            preferred_element_type=jnp.float32)                               # (1, 3H)
        gh = jnp.dot(h_bf, whh_ref[...],
                     preferred_element_type=jnp.float32) + bhh_ref[...]       # (1, 3H)
        # TODO(synk): with H not a multiple of 128 the gate slices below are
        # intra-vreg lane extracts; lane-aligned gate slabs would remove them.
        r = jax.nn.sigmoid(gi[:, 0:H] + gh[:, 0:H])
        z = jax.nn.sigmoid(gi[:, H:2 * H] + gh[:, H:2 * H])
        n = jnp.tanh(gi[:, 2 * H:3 * H] + r * gh[:, 2 * H:3 * H])
        hnew_ref[...] = (1.0 - z) * n + z * h

        m_sc[...] = jnp.full(m_sc.shape, -jnp.inf, m_sc.dtype)
        l_sc[...] = jnp.zeros(l_sc.shape, l_sc.dtype)

    # ---- vocab tile j: logits + online log-sum-exp ----
    h_new_bf = hnew_ref[...].astype(jnp.bfloat16)
    logits = jnp.dot(h_new_bf, wout_ref[...],
                     preferred_element_type=jnp.float32) + bout_ref[...]      # (1, TN)
    col = pl.multiple_of(j * TN, TN)
    out_ref[:, pl.ds(col, TN)] = logits

    m_prev = m_sc[...]
    m_new = jnp.maximum(m_prev, jnp.max(logits, axis=-1, keepdims=True))
    l_sc[...] = (l_sc[...] * jnp.exp(m_prev - m_new)
                 + jnp.sum(jnp.exp(logits - m_new), axis=-1, keepdims=True))
    m_sc[...] = m_new

    # ---- last tile: finalize log_softmax over the whole vocab ----
    @pl.when(j == pl.num_programs(0) - 1)
    def _():
        lse = m_sc[...] + jnp.log(l_sc[...])
        out_ref[...] = out_ref[...] - lse


def init_params(key, hidden_size, output_size):
    H, O = hidden_size, output_size
    ks = jax.random.split(key, 7)
    s = 1.0 / jnp.sqrt(H)
    return {
        "embedding": jax.random.uniform(ks[0], (O, H), jnp.float32, -1.0, 1.0),
        "w_ih": jax.random.uniform(ks[1], (2 * H, 3 * H), jnp.float32, -s, s),
        "w_hh": jax.random.uniform(ks[2], (H, 3 * H), jnp.float32, -s, s),
        "b_ih": jax.random.uniform(ks[3], (1, 3 * H), jnp.float32, -s, s),
        "b_hh": jax.random.uniform(ks[4], (1, 3 * H), jnp.float32, -s, s),
        "w_out": jax.random.uniform(ks[5], (H, O), jnp.float32, -s, s),
        "b_out": jax.random.uniform(ks[6], (1, O), jnp.float32, -s, s),
    }


def prepare_kernel_params(params):
    """One-time weight re-layout: fused embedding-row table (b_ih folded), bf16
    weights, vocab dimension padded to a 128-lane multiple."""
    H = params["w_hh"].shape[0]
    O = params["w_out"].shape[-1]
    O_pad = ((O + 127) // 128) * 128

    # gi_emb(tok) = emb[tok] @ W_ih[:H] + b_ih  -> one (1, 3H) table row per token.
    emb_wih = (jnp.dot(params["embedding"], params["w_ih"][:H, :])
               + params["b_ih"])                                      # (O, 3H)

    w_out, b_out = params["w_out"], params["b_out"]
    if O_pad != O:
        w_out = jnp.pad(w_out, ((0, 0), (0, O_pad - O)))
        b_out = jnp.pad(b_out, ((0, 0), (0, O_pad - O)), constant_values=-1e30)

    return {
        "emb_wih": emb_wih.reshape(O, 1, 3 * H).astype(jnp.bfloat16),  # (O, 1, 3H)
        "wih_ctx": params["w_ih"][H:, :].astype(jnp.bfloat16),         # (H, 3H)
        "w_hh":    params["w_hh"].astype(jnp.bfloat16),                # (H, 3H)
        "b_hh":    params["b_hh"].astype(jnp.float32),                 # (1, 3H)
        "w_out":   w_out.astype(jnp.bfloat16),                         # (H, O_pad)
        "b_out":   b_out.astype(jnp.float32),                          # (1, O_pad)
    }


def bahdanau_decoder_step(words_input, last_hidden, encoder_output, kparams,
                          output_size):
    """words_input: (1,) int; last_hidden: (1, 1, H); encoder_output: (S, 1, H)."""
    H = last_hidden.shape[-1]
    S = encoder_output.shape[0]
    G3 = kparams["w_hh"].shape[-1]          # 3*H
    O_pad = kparams["w_out"].shape[-1]

    TN = 128                                 # vocab tile (multiple of 128)
    for cand in (512, 256):
        if O_pad % cand == 0:
            TN = cand
            break
    n_vt = O_pad // TN

    ids = words_input.astype(jnp.int32).reshape((1,))
    h = last_hidden[-1].astype(jnp.float32)                 # (1, H)
    enc = encoder_output[:, 0, :].astype(jnp.bfloat16)      # (S, H), bf16 MXU feed

    grid_spec = pltpu.PrefetchScalarGridSpec(
        num_scalar_prefetch=1,
        grid=(n_vt,),
        in_specs=[
            pl.BlockSpec((1, H),     lambda j, ids: (0, 0)),           # h
            pl.BlockSpec((S, H),     lambda j, ids: (0, 0)),           # enc
            pl.BlockSpec((1, 1, G3), lambda j, ids: (ids[0], 0, 0)),   # fused emb row
            pl.BlockSpec((H, G3),    lambda j, ids: (0, 0)),           # W_ih (ctx half)
            pl.BlockSpec((H, G3),    lambda j, ids: (0, 0)),           # W_hh
            pl.BlockSpec((1, G3),    lambda j, ids: (0, 0)),           # b_hh
            pl.BlockSpec((H, TN),    lambda j, ids: (0, j)),           # W_out tile
            pl.BlockSpec((1, TN),    lambda j, ids: (0, j)),           # b_out tile
        ],
        out_specs=(
            pl.BlockSpec((1, O_pad), lambda j, ids: (0, 0)),           # log-probs (padded)
            pl.BlockSpec((1, H),     lambda j, ids: (0, 0)),           # new hidden
            pl.BlockSpec((1, S),     lambda j, ids: (0, 0)),           # attention weights
        ),
        scratch_shapes=[pltpu.VMEM((1, 1), jnp.float32),   # running max
                        pltpu.VMEM((1, 1), jnp.float32)],  # running sum of exp
    )

    out_pad, h_new, attw = pl.pallas_call(
        decoder_kernel,
        out_shape=(
            jax.ShapeDtypeStruct((1, O_pad), jnp.float32),
            jax.ShapeDtypeStruct((1, H), jnp.float32),
            jax.ShapeDtypeStruct((1, S), jnp.float32),
        ),
        grid_spec=grid_spec,
        compiler_params=pltpu.CompilerParams(
            dimension_semantics=("arbitrary",)),
    )(ids, h, enc, kparams["emb_wih"], kparams["wih_ctx"], kparams["w_hh"],
      kparams["b_hh"], kparams["w_out"], kparams["b_out"])

    # Match PyTorch output shapes: (1, O), (1, 1, H), (1, 1, S)
    return out_pad[:, :output_size], h_new.reshape(1, 1, H), attw.reshape(1, 1, S)


if __name__ == "__main__":
    hidden_size = 32
    output_size = 64
    seq_len = 8

    key = jax.random.PRNGKey(0)
    k_params, k_hid, k_enc = jax.random.split(key, 3)

    params = init_params(k_params, hidden_size, output_size)
    kparams = prepare_kernel_params(params)   # weight re-layout done once, not per step

    words_input = jnp.array([3], dtype=jnp.int32)                               # single token
    last_hidden = jax.random.normal(k_hid, (1, 1, hidden_size), jnp.float32)    # (n_layers, B, H)
    encoder_output = jax.random.normal(k_enc, (seq_len, 1, hidden_size), jnp.float32)

    decode_step = jax.jit(bahdanau_decoder_step, static_argnames=("output_size",))
    output, hidden, attn_w = decode_step(words_input, last_hidden, encoder_output,
                                         kparams, output_size=output_size)
    jax.block_until_ready((output, hidden, attn_w))

    assert output.shape == (1, output_size)
    assert hidden.shape == (1, 1, hidden_size)
    assert attn_w.shape == (1, 1, seq_len)
    print("KERNEL_OK")
</pallas_src>

<mosaic_0001>
module attributes {stable_mosaic.version = 11 : i64} {
  func.func @decoder_kernel(%arg0: i32, %arg1: memref<1xi32, #tpu.memory_space<smem>>, %arg2: memref<1x32xf32, #tpu.memory_space<vmem>>, %arg3: memref<8x32xbf16, #tpu.memory_space<vmem>>, %arg4: memref<1x1x96xbf16, #tpu.memory_space<vmem>>, %arg5: memref<32x96xbf16, #tpu.memory_space<vmem>>, %arg6: memref<32x96xbf16, #tpu.memory_space<vmem>>, %arg7: memref<1x96xf32, #tpu.memory_space<vmem>>, %arg8: memref<32x128xbf16, #tpu.memory_space<vmem>>, %arg9: memref<1x128xf32, #tpu.memory_space<vmem>>, %arg10: memref<1x128xf32, #tpu.memory_space<vmem>>, %arg11: memref<1x32xf32, #tpu.memory_space<vmem>>, %arg12: memref<1x8xf32, #tpu.memory_space<vmem>>, %arg13: memref<1x1xf32, #tpu.memory_space<vmem>>, %arg14: memref<1x1xf32, #tpu.memory_space<vmem>>) attributes {dimension_semantics = [#tpu.dimension_semantics<arbitrary>], iteration_bounds = array<i64: 1>, scalar_prefetch = 1 : i64, scratch_operands = 2 : i64, tpu.core_type = #tpu.core_type<tc>, window_params = [{pipeline_mode = #tpu.pipeline_mode<synchronous>, transform_indices = @transform_0, window_bounds = array<i64: 1, 32>}, {pipeline_mode = #tpu.pipeline_mode<synchronous>, transform_indices = @transform_1, window_bounds = array<i64: 8, 32>}, {transform_indices = @transform_2, window_bounds = array<i64: 1, 1, 96>}, {pipeline_mode = #tpu.pipeline_mode<synchronous>, transform_indices = @transform_3, window_bounds = array<i64: 32, 96>}, {pipeline_mode = #tpu.pipeline_mode<synchronous>, transform_indices = @transform_4, window_bounds = array<i64: 32, 96>}, {pipeline_mode = #tpu.pipeline_mode<synchronous>, transform_indices = @transform_5, window_bounds = array<i64: 1, 96>}, {transform_indices = @transform_6, window_bounds = array<i64: 32, 128>}, {transform_indices = @transform_7, window_bounds = array<i64: 1, 128>}, {pipeline_mode = #tpu.pipeline_mode<synchronous>, transform_indices = @transform_8, window_bounds = array<i64: 1, 128>}, {pipeline_mode = #tpu.pipeline_mode<synchronous>, transform_indices = @transform_9, window_bounds = array<i64: 1, 32>}, {pipeline_mode = #tpu.pipeline_mode<synchronous>, transform_indices = @transform_10, window_bounds = array<i64: 1, 8>}]} {
    %c0_i32 = arith.constant 0 : i32
    %0 = arith.cmpi eq, %arg0, %c0_i32 : i32
    %1 = arith.extui %0 : i1 to i32
    %c0_i32_0 = arith.constant 0 : i32
    %2 = arith.cmpi ne, %1, %c0_i32_0 : i32
    scf.if %2 {
      %c0_19 = arith.constant 0 : index
      %c0_20 = arith.constant 0 : index
      %32 = vector.load %arg2[%c0_19, %c0_20] : memref<1x32xf32, #tpu.memory_space<vmem>>, vector<1x32xf32>
      %33 = arith.truncf %32 : vector<1x32xf32> to vector<1x32xbf16>
      %c0_21 = arith.constant 0 : index
      %c0_22 = arith.constant 0 : index
      %34 = vector.load %arg3[%c0_21, %c0_22] : memref<8x32xbf16, #tpu.memory_space<vmem>>, vector<8x32xbf16>
      %cst_23 = arith.constant dense<0.000000e+00> : vector<1x8xf32>
      %35 = tpu.matmul %33, %34, %cst_23 {dimension_numbers = #tpu.dot_dimension_numbers<[1], [1], [0], [0], [0, 0, 1, 0], [], []>} : vector<1x32xbf16>, vector<8x32xbf16>, vector<1x8xf32> -> vector<1x8xf32>
      %cst_24 = arith.constant dense<0xFF800000> : vector<1xf32>
      %36 = vector.multi_reduction <maximumf>, %35, %cst_24 [1] : vector<1x8xf32> to vector<1xf32>
      %37 = vector.shape_cast %36 : vector<1xf32> to vector<1x1xf32>
      %38 = vector.broadcast %37 : vector<1x1xf32> to vector<1x8xf32>
      %39 = arith.subf %35, %38 : vector<1x8xf32>
      %40 = math.exp %39 : vector<1x8xf32>
      %cst_25 = arith.constant dense<0.000000e+00> : vector<1xf32>
      %41 = vector.multi_reduction <add>, %40, %cst_25 [1] : vector<1x8xf32> to vector<1xf32>
      %42 = vector.shape_cast %41 : vector<1xf32> to vector<1x1xf32>
      %43 = vector.broadcast %42 : vector<1x1xf32> to vector<1x8xf32>
      %44 = arith.divf %40, %43 : vector<1x8xf32>
      %c0_26 = arith.constant 0 : index
      %c0_27 = arith.constant 0 : index
      %45 = vector.load %arg12[%c0_26, %c0_27] : memref<1x8xf32, #tpu.memory_space<vmem>>, vector<1x8xf32>
      tpu.vector_store %arg12[%c0_26, %c0_27], %44 {strides = array<i32>} : memref<1x8xf32, #tpu.memory_space<vmem>>, vector<1x8xf32>,
      %46 = arith.truncf %44 : vector<1x8xf32> to vector<1x8xbf16>
      %cst_28 = arith.constant dense<0.000000e+00> : vector<1x32xf32>
      %47 = tpu.matmul %46, %34, %cst_28 {dimension_numbers = #tpu.dot_dimension_numbers<[1], [0], [0], [1], [0, 0, 1, 1], [], []>} : vector<1x8xbf16>, vector<8x32xbf16>, vector<1x32xf32> -> vector<1x32xf32>
      %c0_29 = arith.constant 0 : index
      %c0_30 = arith.constant 0 : index
      %c0_31 = arith.constant 0 : index
      %48 = vector.load %arg4[%c0_29, %c0_30, %c0_31] : memref<1x1x96xbf16, #tpu.memory_space<vmem>>, vector<1x1x96xbf16>
      %49 = vector.shape_cast %48 : vector<1x1x96xbf16> to vector<1x96xbf16>
      %50 = arith.extf %49 : vector<1x96xbf16> to vector<1x96xf32>
      %51 = arith.truncf %47 : vector<1x32xf32> to vector<1x32xbf16>
      %c0_32 = arith.constant 0 : index
      %c0_33 = arith.constant 0 : index
      %52 = vector.load %arg5[%c0_32, %c0_33] : memref<32x96xbf16, #tpu.memory_space<vmem>>, vector<32x96xbf16>
      %cst_34 = arith.constant dense<0.000000e+00> : vector<1x96xf32>
      %53 = tpu.matmul %51, %52, %cst_34 {dimension_numbers = #tpu.dot_dimension_numbers<[1], [0], [0], [1], [0, 0, 1, 1], [], []>} : vector<1x32xbf16>, vector<32x96xbf16>, vector<1x96xf32> -> vector<1x96xf32>
      %54 = arith.addf %50, %53 : vector<1x96xf32>
      %c0_35 = arith.constant 0 : index
      %c0_36 = arith.constant 0 : index
      %55 = vector.load %arg6[%c0_35, %c0_36] : memref<32x96xbf16, #tpu.memory_space<vmem>>, vector<32x96xbf16>
      %cst_37 = arith.constant dense<0.000000e+00> : vector<1x96xf32>
      %56 = tpu.matmul %33, %55, %cst_37 {dimension_numbers = #tpu.dot_dimension_numbers<[1], [0], [0], [1], [0, 0, 1, 1], [], []>} : vector<1x32xbf16>, vector<32x96xbf16>, vector<1x96xf32> -> vector<1x96xf32>
      %c0_38 = arith.constant 0 : index
      %c0_39 = arith.constant 0 : index
      %57 = vector.load %arg7[%c0_38, %c0_39] : memref<1x96xf32, #tpu.memory_space<vmem>>, vector<1x96xf32>
      %58 = arith.addf %56, %57 : vector<1x96xf32>
      %59 = vector.extract_strided_slice %54 {offsets = [0, 0], sizes = [1, 32], strides = [1, 1]} : vector<1x96xf32> to vector<1x32xf32>
      %60 = vector.extract_strided_slice %58 {offsets = [0, 0], sizes = [1, 32], strides = [1, 1]} : vector<1x96xf32> to vector<1x32xf32>
      %61 = arith.addf %59, %60 : vector<1x32xf32>
      %62 = arith.negf %61 : vector<1x32xf32>
      %63 = math.exp %62 : vector<1x32xf32>
      %cst_40 = arith.constant 1.000000e+00 : f32
      %64 = vector.broadcast %cst_40 : f32 to vector<1x32xf32>
      %65 = arith.addf %64, %63 : vector<1x32xf32>
      %66 = arith.divf %64, %65 : vector<1x32xf32>
      %67 = vector.extract_strided_slice %54 {offsets = [0, 32], sizes = [1, 32], strides = [1, 1]} : vector<1x96xf32> to vector<1x32xf32>
      %68 = vector.extract_strided_slice %58 {offsets = [0, 32], sizes = [1, 32], strides = [1, 1]} : vector<1x96xf32> to vector<1x32xf32>
      %69 = arith.addf %67, %68 : vector<1x32xf32>
      %70 = arith.negf %69 : vector<1x32xf32>
      %71 = math.exp %70 : vector<1x32xf32>
      %cst_41 = arith.constant 1.000000e+00 : f32
      %72 = vector.broadcast %cst_41 : f32 to vector<1x32xf32>
      %73 = arith.addf %72, %71 : vector<1x32xf32>
      %74 = arith.divf %72, %73 : vector<1x32xf32>
      %75 = vector.extract_strided_slice %54 {offsets = [0, 64], sizes = [1, 32], strides = [1, 1]} : vector<1x96xf32> to vector<1x32xf32>
      %76 = vector.extract_strided_slice %58 {offsets = [0, 64], sizes = [1, 32], strides = [1, 1]} : vector<1x96xf32> to vector<1x32xf32>
      %77 = arith.mulf %66, %76 : vector<1x32xf32>
      %78 = arith.addf %75, %77 : vector<1x32xf32>
      %79 = math.tanh %78 : vector<1x32xf32>
      %cst_42 = arith.constant 1.000000e+00 : f32
      %80 = vector.broadcast %cst_42 : f32 to vector<1x32xf32>
      %81 = arith.subf %80, %74 : vector<1x32xf32>
      %82 = arith.mulf %81, %79 : vector<1x32xf32>
      %83 = arith.mulf %74, %32 : vector<1x32xf32>
      %84 = arith.addf %82, %83 : vector<1x32xf32>
      %c0_43 = arith.constant 0 : index
      %c0_44 = arith.constant 0 : index
      %85 = vector.load %arg11[%c0_43, %c0_44] : memref<1x32xf32, #tpu.memory_space<vmem>>, vector<1x32xf32>
      tpu.vector_store %arg11[%c0_43, %c0_44], %84 {strides = array<i32>} : memref<1x32xf32, #tpu.memory_space<vmem>>, vector<1x32xf32>,
      %cst_45 = arith.constant 0xFF800000 : f32
      %86 = vector.broadcast %cst_45 : f32 to vector<1x1xf32>
      %c0_46 = arith.constant 0 : index
      %c0_47 = arith.constant 0 : index
      %87 = vector.load %arg13[%c0_46, %c0_47] : memref<1x1xf32, #tpu.memory_space<vmem>>, vector<1x1xf32>
      tpu.vector_store %arg13[%c0_46, %c0_47], %86 {strides = array<i32>} : memref<1x1xf32, #tpu.memory_space<vmem>>, vector<1x1xf32>,
      %cst_48 = arith.constant 0.000000e+00 : f32
      %88 = vector.broadcast %cst_48 : f32 to vector<1x1xf32>
      %c0_49 = arith.constant 0 : index
      %c0_50 = arith.constant 0 : index
      %89 = vector.load %arg14[%c0_49, %c0_50] : memref<1x1xf32, #tpu.memory_space<vmem>>, vector<1x1xf32>
      tpu.vector_store %arg14[%c0_49, %c0_50], %88 {strides = array<i32>} : memref<1x1xf32, #tpu.memory_space<vmem>>, vector<1x1xf32>,
    } else {
    }
    %c0 = arith.constant 0 : index
    %c0_1 = arith.constant 0 : index
    %3 = vector.load %arg11[%c0, %c0_1] : memref<1x32xf32, #tpu.memory_space<vmem>>, vector<1x32xf32>
    %4 = arith.truncf %3 : vector<1x32xf32> to vector<1x32xbf16>
    %c0_2 = arith.constant 0 : index
    %c0_3 = arith.constant 0 : index
    %5 = vector.load %arg8[%c0_2, %c0_3] : memref<32x128xbf16, #tpu.memory_space<vmem>>, vector<32x128xbf16>
    %cst = arith.constant dense<0.000000e+00> : vector<1x128xf32>
    %6 = tpu.matmul %4, %5, %cst {dimension_numbers = #tpu.dot_dimension_numbers<[1], [0], [0], [1], [0, 0, 1, 1], [], []>} : vector<1x32xbf16>, vector<32x128xbf16>, vector<1x128xf32> -> vector<1x128xf32>
    %c0_4 = arith.constant 0 : index
    %c0_5 = arith.constant 0 : index
    %7 = vector.load %arg9[%c0_4, %c0_5] : memref<1x128xf32, #tpu.memory_space<vmem>>, vector<1x128xf32>
    %8 = arith.addf %6, %7 : vector<1x128xf32>
    %c128_i32 = arith.constant 128 : i32
    %9 = arith.muli %arg0, %c128_i32 : i32
    %10 = tpu.assume_multiple %9, 128 : i32
    %c0_6 = arith.constant 0 : index
    %11 = arith.index_cast %10 : i32 to index
    %12 = vector.load %arg10[%c0_6, %11] : memref<1x128xf32, #tpu.memory_space<vmem>>, vector<1x128xf32>
    tpu.vector_store %arg10[%c0_6, %11], %8 {strides = array<i32>} : memref<1x128xf32, #tpu.memory_space<vmem>>, vector<1x128xf32>,
    %c0_7 = arith.constant 0 : index
    %c0_8 = arith.constant 0 : index
    %13 = vector.load %arg13[%c0_7, %c0_8] : memref<1x1xf32, #tpu.memory_space<vmem>>, vector<1x1xf32>
    %cst_9 = arith.constant dense<0xFF800000> : vector<1xf32>
    %14 = vector.multi_reduction <maximumf>, %8, %cst_9 [1] : vector<1x128xf32> to vector<1xf32>
    %15 = vector.shape_cast %14 : vector<1xf32> to vector<1x1xf32>
    %16 = arith.maximumf %13, %15 : vector<1x1xf32>
    %c0_10 = arith.constant 0 : index
    %c0_11 = arith.constant 0 : index
    %17 = vector.load %arg14[%c0_10, %c0_11] : memref<1x1xf32, #tpu.memory_space<vmem>>, vector<1x1xf32>
    %18 = arith.subf %13, %16 : vector<1x1xf32>
    %19 = math.exp %18 : vector<1x1xf32>
    %20 = arith.mulf %17, %19 : vector<1x1xf32>
    %21 = vector.broadcast %16 : vector<1x1xf32> to vector<1x128xf32>
    %22 = arith.subf %8, %21 : vector<1x128xf32>
    %23 = math.exp %22 : vector<1x128xf32>
    %cst_12 = arith.constant dense<0.000000e+00> : vector<1xf32>
    %24 = vector.multi_reduction <add>, %23, %cst_12 [1] : vector<1x128xf32> to vector<1xf32>
    %25 = vector.shape_cast %24 : vector<1xf32> to vector<1x1xf32>
    %26 = arith.addf %20, %25 : vector<1x1xf32>
    %c0_13 = arith.constant 0 : index
    %c0_14 = arith.constant 0 : index
    %27 = vector.load %arg14[%c0_13, %c0_14] : memref<1x1xf32, #tpu.memory_space<vmem>>, vector<1x1xf32>
    tpu.vector_store %arg14[%c0_13, %c0_14], %26 {strides = array<i32>} : memref<1x1xf32, #tpu.memory_space<vmem>>, vector<1x1xf32>,
    %c0_15 = arith.constant 0 : index
    %c0_16 = arith.constant 0 : index
    %28 = vector.load %arg13[%c0_15, %c0_16] : memref<1x1xf32, #tpu.memory_space<vmem>>, vector<1x1xf32>
    tpu.vector_store %arg13[%c0_15, %c0_16], %16 {strides = array<i32>} : memref<1x1xf32, #tpu.memory_space<vmem>>, vector<1x1xf32>,
    %c0_i32_17 = arith.constant 0 : i32
    %29 = arith.cmpi eq, %arg0, %c0_i32_17 : i32
    %30 = arith.extui %29 : i1 to i32
    %c0_i32_18 = arith.constant 0 : i32
    %31 = arith.cmpi ne, %30, %c0_i32_18 : i32
    scf.if %31 {
      %c0_19 = arith.constant 0 : index
      %c0_20 = arith.constant 0 : index
      %32 = vector.load %arg13[%c0_19, %c0_20] : memref<1x1xf32, #tpu.memory_space<vmem>>, vector<1x1xf32>
      %c0_21 = arith.constant 0 : index
      %c0_22 = arith.constant 0 : index
      %33 = vector.load %arg14[%c0_21, %c0_22] : memref<1x1xf32, #tpu.memory_space<vmem>>, vector<1x1xf32>
      %34 = math.log %33 : vector<1x1xf32>
      %35 = arith.addf %32, %34 : vector<1x1xf32>
      %c0_23 = arith.constant 0 : index
      %c0_24 = arith.constant 0 : index
      %36 = vector.load %arg10[%c0_23, %c0_24] : memref<1x128xf32, #tpu.memory_space<vmem>>, vector<1x128xf32>
      %37 = vector.broadcast %35 : vector<1x1xf32> to vector<1x128xf32>
      %38 = arith.subf %36, %37 : vector<1x128xf32>
      %c0_25 = arith.constant 0 : index
      %c0_26 = arith.constant 0 : index
      %39 = vector.load %arg10[%c0_25, %c0_26] : memref<1x128xf32, #tpu.memory_space<vmem>>, vector<1x128xf32>
      tpu.vector_store %arg10[%c0_25, %c0_26], %38 {strides = array<i32>} : memref<1x128xf32, #tpu.memory_space<vmem>>, vector<1x128xf32>,
    } else {
    }
    return
  }
  func.func @transform_0(%arg0: i32, %arg1: memref<1xi32, #tpu.memory_space<smem>>) -> (i32, i32) {
    %c0_i32 = arith.constant 0 : i32
    %c0_i32_0 = arith.constant 0 : i32
    %c0_i32_1 = arith.constant 0 : i32
    return %c0_i32, %c0_i32_0 : i32, i32
  }
  func.func @transform_1(%arg0: i32, %arg1: memref<1xi32, #tpu.memory_space<smem>>) -> (i32, i32) {
    %c0_i32 = arith.constant 0 : i32
    %c0_i32_0 = arith.constant 0 : i32
    %c0_i32_1 = arith.constant 0 : i32
    return %c0_i32, %c0_i32_0 : i32, i32
  }
  func.func @transform_2(%arg0: i32, %arg1: memref<1xi32, #tpu.memory_space<smem>>) -> (i32, i32, i32) {
    %c0 = arith.constant 0 : index
    %0 = memref.load %arg1[%c0] : memref<1xi32, #tpu.memory_space<smem>>
    %c0_i32 = arith.constant 0 : i32
    %c0_i32_0 = arith.constant 0 : i32
    %c0_i32_1 = arith.constant 0 : i32
    return %0, %c0_i32, %c0_i32_0 : i32, i32, i32
  }
  func.func @transform_3(%arg0: i32, %arg1: memref<1xi32, #tpu.memory_space<smem>>) -> (i32, i32) {
    %c0_i32 = arith.constant 0 : i32
    %c0_i32_0 = arith.constant 0 : i32
    %c0_i32_1 = arith.constant 0 : i32
    return %c0_i32, %c0_i32_0 : i32, i32
  }
  func.func @transform_4(%arg0: i32, %arg1: memref<1xi32, #tpu.memory_space<smem>>) -> (i32, i32) {
    %c0_i32 = arith.constant 0 : i32
    %c0_i32_0 = arith.constant 0 : i32
    %c0_i32_1 = arith.constant 0 : i32
    return %c0_i32, %c0_i32_0 : i32, i32
  }
  func.func @transform_5(%arg0: i32, %arg1: memref<1xi32, #tpu.memory_space<smem>>) -> (i32, i32) {
    %c0_i32 = arith.constant 0 : i32
    %c0_i32_0 = arith.constant 0 : i32
    %c0_i32_1 = arith.constant 0 : i32
    return %c0_i32, %c0_i32_0 : i32, i32
  }
  func.func @transform_6(%arg0: i32, %arg1: memref<1xi32, #tpu.memory_space<smem>>) -> (i32, i32) {
    %c0_i32 = arith.constant 0 : i32
    %c0_i32_0 = arith.constant 0 : i32
    return %c0_i32, %arg0 : i32, i32
  }
  func.func @transform_7(%arg0: i32, %arg1: memref<1xi32, #tpu.memory_space<smem>>) -> (i32, i32) {
    %c0_i32 = arith.constant 0 : i32
    %c0_i32_0 = arith.constant 0 : i32
    return %c0_i32, %arg0 : i32, i32
  }
  func.func @transform_8(%arg0: i32, %arg1: memref<1xi32, #tpu.memory_space<smem>>) -> (i32, i32) {
    %c0_i32 = arith.constant 0 : i32
    %c0_i32_0 = arith.constant 0 : i32
    %c0_i32_1 = arith.constant 0 : i32
    return %c0_i32, %c0_i32_0 : i32, i32
  }
  func.func @transform_9(%arg0: i32, %arg1: memref<1xi32, #tpu.memory_space<smem>>) -> (i32, i32) {
    %c0_i32 = arith.constant 0 : i32
    %c0_i32_0 = arith.constant 0 : i32
    %c0_i32_1 = arith.constant 0 : i32
    return %c0_i32, %c0_i32_0 : i32, i32
  }
  func.func @transform_10(%arg0: i32, %arg1: memref<1xi32, #tpu.memory_space<smem>>) -> (i32, i32) {
    %c0_i32 = arith.constant 0 : i32
    %c0_i32_0 = arith.constant 0 : i32
    %c0_i32_1 = arith.constant 0 : i32
    return %c0_i32, %c0_i32_0 : i32, i32
  }
}

</mosaic_0001>

<llo_original>
// kernel: bahdanau_decoder_step.1
$region0: #{bahdanau_decoder_step.1}
  #allocation0 [shape = 'u32[]', space=smem, size = 0x4, offset = 0x4, fixed_abs, tag = 'smem constant byte address 0x4 - core index']
  #allocation1 [shape = 'u32[144,128]{1,0:T(1,128)}', space=vmem, size = 0x12000, scoped, tag = 'internal scratch']
  #allocation2 [shape = 'f32[1,1]{1,0:T(1,128)}', space=vmem, size = 0x200, scoped, tag = 'scratch operand']
  #allocation3 [shape = 'f32[1,1]{1,0:T(1,128)}', space=vmem, size = 0x200, scoped, tag = 'scratch operand']
  #allocation4 [shape = 's32[1]{0}', space=sflag, size = 0x4, scoped, tag = 'scoped memory for bahdanau_decoder_step.1']
  #allocation5 [shape = 's32[1]{0:T(128)S(6)}', space=smem, size = 0x200, scoped, tag = 'prefetched SMEM operand 0']
  %s0 = inlined_call_operand.<no memory space> [shape: s32[1], index: 0, kind: input, shape index: {}]
  %s1 = inlined_call_operand.vmem [shape: f32[1,32], index: 1, kind: input, shape index: {}]
  %s2 = inlined_call_operand.vmem [shape: bf16[8,32], index: 2, kind: input, shape index: {}]
  %s3 = inlined_call_operand.vmem [shape: bf16[64,1,96], index: 3, kind: input, shape index: {}]
  %s4 = inlined_call_operand.vmem [shape: bf16[32,96], index: 4, kind: input, shape index: {}]
  %s5 = inlined_call_operand.vmem [shape: bf16[32,96], index: 5, kind: input, shape index: {}]
  %s6 = inlined_call_operand.vmem [shape: f32[1,96], index: 6, kind: input, shape index: {}]
  %s7 = inlined_call_operand.vmem [shape: bf16[32,128], index: 7, kind: input, shape index: {}]
  %s8 = inlined_call_operand.vmem [shape: f32[1,128], index: 8, kind: input, shape index: {}]
  %s9 = inlined_call_operand.hbm [shape: f32[1,128], index: 9, kind: output, shape index: {0}]
  %s10 = inlined_call_operand.hbm [shape: f32[1,32], index: 10, kind: output, shape index: {1}]
  %s11 = inlined_call_operand.hbm [shape: f32[1,8], index: 11, kind: output, shape index: {2}]
  %12 = xla_tuple %s9, %s10, %s11
  %s13 = sld [smem:[#allocation0]]
  $region66: #{bahdanau_decoder_step.1} parent=0
    _
  %s15 = ssub.s32 1, %s13
  %s16 = scalar_select 0, %s15, %s13
  %17 = sst [smem:[#allocation5]] %s0
  $region1: #{bahdanau_decoder_step.1} parent=0
    #allocation6 [shape = 'u8[512]{0}', space=vmem, size = 0x400, scoped, tag = 'output window, operand 0, single buffered']
    #allocation7 [shape = 's32[1]{0}', space=sflag, size = 0x4, scoped, tag = 'scoped memory for bahdanau_decoder_step.1']
    #allocation8 [shape = 'u8[512]{0}', space=vmem, size = 0x400, scoped, tag = 'output window, operand 1, single buffered']
    #allocation9 [shape = 's32[1]{0}', space=sflag, size = 0x4, scoped, tag = 'scoped memory for bahdanau_decoder_step.1']
    #allocation10 [shape = 'u8[512]{0}', space=vmem, size = 0x400, scoped, tag = 'output window, operand 2, single buffered']
    %18 = vsyncpa [#allocation7], 0
    %19 = vsyncpa [#allocation9], 0
    // Predicated region
    $region2: #{bahdanau_decoder_step.1} parent=1 // pred_check
      _
    $region3: #{bahdanau_decoder_step.1} parent=1 // pred_check_branch
      %21 = sbr.rel (0) target = $region5
    $region4: #{bahdanau_decoder_step.1} parent=1 // pred_region
      _
    $region5: #{bahdanau_decoder_step.1} parent=1 // pred_fallthru
      _
    // Predicated region
    $region6: #{bahdanau_decoder_step.1} parent=1 // pred_check
      _
    $region7: #{bahdanau_decoder_step.1} parent=1 // pred_check_branch
      %23 = sbr.rel (0) target = $region9
    $region8: #{bahdanau_decoder_step.1} parent=1 // pred_region
      _
    $region9: #{bahdanau_decoder_step.1} parent=1 // pred_fallthru
      _
    // Predicated region
    $region10: #{bahdanau_decoder_step.1} parent=1 // pred_check
      _
    $region11: #{bahdanau_decoder_step.1} parent=1 // pred_check_branch
      %25 = sbr.rel (0) target = $region13
    $region12: #{bahdanau_decoder_step.1} parent=1 // pred_region
      %s26 = sld [smem:[#allocation5]]
      %p27 = scmp.lt.s32.totalorder %s26, 63
      %s28 = scalar_select %p27, %s26, 63
      %s29 = scalar_lea.vmem %s3, %s28
      %s30 = sld [smem:[#allocation5]]
    $region13: #{bahdanau_decoder_step.1} parent=1 // pred_fallthru
      _
    // Predicated region
    $region14: #{bahdanau_decoder_step.1} parent=1 // pred_check
      _
    $region15: #{bahdanau_decoder_step.1} parent=1 // pred_check_branch
      %32 = sbr.rel (0) target = $region17
    $region16: #{bahdanau_decoder_step.1} parent=1 // pred_region
      _
    $region17: #{bahdanau_decoder_step.1} parent=1 // pred_fallthru
      _
    // Predicated region
    $region18: #{bahdanau_decoder_step.1} parent=1 // pred_check
      _
    $region19: #{bahdanau_decoder_step.1} parent=1 // pred_check_branch
      %34 = sbr.rel (0) target = $region21
    $region20: #{bahdanau_decoder_step.1} parent=1 // pred_region
      _
    $region21: #{bahdanau_decoder_step.1} parent=1 // pred_fallthru
      _
    // Predicated region
    $region22: #{bahdanau_decoder_step.1} parent=1 // pred_check
      _
    $region23: #{bahdanau_decoder_step.1} parent=1 // pred_check_branch
      %36 = sbr.rel (0) target = $region25
    $region24: #{bahdanau_decoder_step.1} parent=1 // pred_region
      _
    $region25: #{bahdanau_decoder_step.1} parent=1 // pred_fallthru
      _
    // Predicated region
    $region26: #{bahdanau_decoder_step.1} parent=1 // pred_check
      _
    $region27: #{bahdanau_decoder_step.1} parent=1 // pred_check_branch
      %38 = sbr.rel (0) target = $region29
    $region28: #{bahdanau_decoder_step.1} parent=1 // pred_region
      _
    $region29: #{bahdanau_decoder_step.1} parent=1 // pred_fallthru
      _
    // Predicated region
    $region30: #{bahdanau_decoder_step.1} parent=1 // pred_check
      _
    $region31: #{bahdanau_decoder_step.1} parent=1 // pred_check_branch
      %40 = sbr.rel (0) target = $region33
    $region32: #{bahdanau_decoder_step.1} parent=1 // pred_region
      _
    $region33: #{bahdanau_decoder_step.1} parent=1 // pred_fallthru
      _
    %s41 = sld [smem:[#allocation5]]
    %p42 = scmp.lt.s32.totalorder %s41, 63
    %s43 = scalar_select %p42, %s41, 63
    %s44 = scalar_lea.vmem %s3, %s43
    %s45 = sld [smem:[#allocation5]]
    %p46 = scmp.lt.s32.totalorder %s45, 63
    %s47 = scalar_select %p46, %s45, 63
    %s48 = scalar_lea.vmem %s3, %s47
    %s49 = sld [smem:[#allocation5]]
    %p51 = scmp.eq.s32.totalorder 0, 0
    // Predicated region
    $region34: #{bahdanau_decoder_step.1} parent=1 // pred_check
      %p52 = pneg %p51
    $region35: #{bahdanau_decoder_step.1} parent=1 // pred_check_branch
      %54 = sbr.rel (%p52) target = $region37
    $region36: #{bahdanau_decoder_step.1} parent=1 // pred_region
      %v55 = vld [vmem:[%s1] sm:$0x1]
      %v56 = vpack.c.bf16 %v55, %v55
      %v57 = vld [vmem:[%s2] sm:$0xf]
      %vm58 = vcmask 261120
      %v60 = vsel %vm58, %v56, 0
      %v63 = vsel %vm58, %v57, 0
      %65 = vmatprep.subr.bf16.mxu0 0
      %66 = vmatpush1.bf16.xpose.msra.mxu0 0
      %67 = vmatprep.subr.bf16.mxu0 0
      %68 = vmatpush1.bf16.xpose.msra.mxu0 0
      %69 = vmatprep.subr.bf16.mxu0 0
      %70 = vmatpush1.bf16.xpose.msra.mxu0 0
      %71 = vmatprep.subr.bf16.mxu0 0
      %72 = vmatpush1.bf16.xpose.msra.mxu0 0
      %73 = vmatprep.subr.bf16.mxu0 0
      %74 = vmatpush1.bf16.xpose.msra.mxu0 0
      %75 = vmatprep.subr.bf16.mxu0 0
      %76 = vmatpush1.bf16.xpose.msra.mxu0 0
      %77 = vmatprep.subr.bf16.mxu0 0
      %78 = vmatpush1.bf16.xpose.msra.mxu0 0
      %79 = vmatprep.subr.bf16.mxu0 0
      %80 = vmatpush1.bf16.xpose.msra.mxu0 %v63
      %81 = vmatprep.subr.bf16.mxu0 0
      %82 = vmatpush2.bf16.xpose.msra.mxu0 0
      %83 = vmatprep.subr.bf16.mxu0 0
      %84 = vmatpush2.bf16.xpose.msra.mxu0 0
      %85 = vmatprep.subr.bf16.mxu0 0
      %86 = vmatpush2.bf16.xpose.msra.mxu0 0
      %87 = vmatprep.subr.bf16.mxu0 0
      %88 = vmatpush2.bf16.xpose.msra.mxu0 0
      %89 = vmatprep.subr.bf16.mxu0 0
      %90 = vmatpush2.bf16.xpose.msra.mxu0 0
      %91 = vmatprep.subr.bf16.mxu0 0
      %92 = vmatpush2.bf16.xpose.msra.mxu0 0
      %93 = vmatprep.subr.bf16.mxu0 0
      %94 = vmatpush2.bf16.xpose.msra.mxu0 0
      %95 = vmatprep.subr.bf16.mxu0 0
      %96 = vmatpush2.bf16.xpose.msra.mxu0 0
      %97 = vmatprep.mubr.bf16.mxu0 0
      %98 = vmatmul.mubr.bf16.gmra.mxu0 %v60
      %v99 = vpop.f32.mrf.mxu0
      %v100 = vadd.f32 0.0, %v99
      %v101 = vpop.f32.mrf.mxu0
      %v102 = vpop.f32.mrf.mxu0
      %v103 = vpop.f32.mrf.mxu0
      %104 = vdwg.mxu0
      %vm105 = vcmask 57344
      %v106 = vsel %vm105, %v100, -inf
      %107 = vmax.xlane.f32.xlu0 %v106
      %v108 = vpop.xlane.xlu0 %107
      %v109 = vsub.f32 %v100, %v108
      %v110 = vmul.f32 %v109, 1.442695
      %v111 = vpow.pop %v110
      %v112 = vsel %vm105, %v111, 0.0
      %113 = vadd.xlane.f32.xlu0 %v112
      %v114 = vpop.xlane.xlu0 %113
      %v115 = vrcp.pop %v114
      %v116 = vmul.f32 %v111, %v115
      %117 = vst.msk [vmem:[#allocation10] sm:$0x1] %vm105, %v116
      %v118 = vpack.c.bf16 %v116, %v116
      %vm119 = vcmask 64512
      %v121 = vsel %vm119, %v118, 0
      %vm123 = vcmask 1043456
      %v124 = vsel %vm123, %v57, 0
      %126 = vmatprep.subr.bf16.mxu0 0
      %127 = vmatpush1.bf16.msra.mxu0 0
      %128 = vmatprep.subr.bf16.mxu0 0
      %129 = vmatpush1.bf16.msra.mxu0 0
      %130 = vmatprep.subr.bf16.mxu0 0
      %131 = vmatpush1.bf16.msra.mxu0 0
      %132 = vmatprep.subr.bf16.mxu0 0
      %133 = vmatpush1.bf16.msra.mxu0 0
      %134 = vmatprep.subr.bf16.mxu0 0
      %135 = vmatpush1.bf16.msra.mxu0 0
      %136 = vmatprep.subr.bf16.mxu0 0
      %137 = vmatpush1.bf16.msra.mxu0 0
      %138 = vmatprep.subr.bf16.mxu0 0
      %139 = vmatpush1.bf16.msra.mxu0 0
      %140 = vmatprep.subr.bf16.mxu0 0
      %141 = vmatpush1.bf16.msra.mxu0 %v124
      %142 = vmatprep.subr.bf16.mxu0 0
      %143 = vmatpush2.bf16.msra.mxu0 0
      %144 = vmatprep.subr.bf16.mxu0 0
      %145 = vmatpush2.bf16.msra.mxu0 0
      %146 = vmatprep.subr.bf16.mxu0 0
      %147 = vmatpush2.bf16.msra.mxu0 0
      %148 = vmatprep.subr.bf16.mxu0 0
      %149 = vmatpush2.bf16.msra.mxu0 0
      %150 = vmatprep.subr.bf16.mxu0 0
      %151 = vmatpush2.bf16.msra.mxu0 0
      %152 = vmatprep.subr.bf16.mxu0 0
      %153 = vmatpush2.bf16.msra.mxu0 0
      %154 = vmatprep.subr.bf16.mxu0 0
      %155 = vmatpush2.bf16.msra.mxu0 0
      %156 = vmatprep.subr.bf16.mxu0 0
      %157 = vmatpush2.bf16.msra.mxu0 0
      %158 = vmatprep.mubr.bf16.mxu0 0
      %159 = vmatmul.mubr.bf16.gmra.mxu0 %v121
      %v160 = vpop.f32.mrf.mxu0
      %v161 = vadd.f32 0.0, %v160
      %v162 = vpop.f32.mrf.mxu0
      %v163 = vpop.f32.mrf.mxu0
      %v164 = vpop.f32.mrf.mxu0
      %165 = vdwg.mxu0
      %v166 = vld [vmem:[%s48] sm:$0x1]
      %v167 = vunpack.c.l.bf16 %v166
      %v168 = vpack.c.bf16 %v161, %v161
      %v169 = vld [vmem:[%s4] sm:$0xf]
      %v170 = vld [vmem:[%s4 + $0x4] sm:$0xf]
      %v171 = vld [vmem:[%s4 + $0x8] sm:$0xf]
      %v172 = vld [vmem:[%s4 + $0xc] sm:$0xf]
      %v177 = vunpack.c.l.b16 %v169
      %v178 = vunpack.c.l.b16 %v170
      %v179 = vunpack.c.l.b16 %v171
      %v180 = vunpack.c.l.b16 %v172
      %v181 = vpack.c.b16 %v178, %v177
      %v182 = vpack.c.b16 %v180, %v179
      %v186 = vsel %vm58, %v168, 0
      %188 = vmatprep.subr.bf16.mxu0 0
      %189 = vmatpush1.bf16.msra.mxu0 0
      %190 = vmatprep.subr.bf16.mxu0 0
      %191 = vmatpush1.bf16.msra.mxu0 0
      %192 = vmatprep.subr.bf16.mxu0 0
      %193 = vmatpush1.bf16.msra.mxu0 0
      %194 = vmatprep.subr.bf16.mxu0 0
      %195 = vmatpush1.bf16.msra.mxu0 0
      %196 = vmatprep.subr.bf16.mxu0 0
      %197 = vmatpush1.bf16.msra.mxu0 0
      %198 = vmatprep.subr.bf16.mxu0 0
      %199 = vmatpush1.bf16.msra.mxu0 0
      %200 = vmatprep.subr.bf16.mxu0 0
      %201 = vmatpush1.bf16.msra.mxu0 %v182
      %202 = vmatprep.subr.bf16.mxu0 0
      %203 = vmatpush1.bf16.msra.mxu0 %v181
      %204 = vmatprep.subr.bf16.mxu0 0
      %205 = vmatpush2.bf16.msra.mxu0 0
      %206 = vmatprep.subr.bf16.mxu0 0
      %207 = vmatpush2.bf16.msra.mxu0 0
      %208 = vmatprep.subr.bf16.mxu0 0
      %209 = vmatpush2.bf16.msra.mxu0 0
      %210 = vmatprep.subr.bf16.mxu0 0
      %211 = vmatpush2.bf16.msra.mxu0 0
      %212 = vmatprep.subr.bf16.mxu0 0
      %213 = vmatpush2.bf16.msra.mxu0 0
      %214 = vmatprep.subr.bf16.mxu0 0
      %215 = vmatpush2.bf16.msra.mxu0 0
      %216 = vmatprep.subr.bf16.mxu0 0
      %217 = vmatpush2.bf16.msra.mxu0 0
      %218 = vmatprep.subr.bf16.mxu0 0
      %219 = vmatpush2.bf16.msra.mxu0 0
      %220 = vmatprep.mubr.bf16.mxu0 0
      %221 = vmatmul.mubr.bf16.gmra.mxu0 %v186
      %v222 = vpop.f32.mrf.mxu0
      %v223 = vadd.f32 0.0, %v222
      %v224 = vpop.f32.mrf.mxu0
      %v225 = vpop.f32.mrf.mxu0
      %v226 = vpop.f32.mrf.mxu0
      %227 = vdwg.mxu0
      %v228 = vadd.f32 %v167, %v223
      %v229 = vld [vmem:[%s5] sm:$0xf]
      %v230 = vld [vmem:[%s5 + $0x4] sm:$0xf]
      %v231 = vld [vmem:[%s5 + $0x8] sm:$0xf]
      %v232 = vld [vmem:[%s5 + $0xc] sm:$0xf]
      %v233 = vld [vmem:[%s6] sm:$0x1]
      %v238 = vunpack.c.l.b16 %v229
      %v239 = vunpack.c.l.b16 %v230
      %v240 = vunpack.c.l.b16 %v231
      %v241 = vunpack.c.l.b16 %v232
      %v242 = vpack.c.b16 %v239, %v238
      %v243 = vpack.c.b16 %v241, %v240
      %246 = vmatprep.subr.bf16.mxu0 0
      %247 = vmatpush1.bf16.msra.mxu0 0
      %248 = vmatprep.subr.bf16.mxu0 0
      %249 = vmatpush1.bf16.msra.mxu0 0
      %250 = vmatprep.subr.bf16.mxu0 0
      %251 = vmatpush1.bf16.msra.mxu0 0
      %252 = vmatprep.subr.bf16.mxu0 0
      %253 = vmatpush1.bf16.msra.mxu0 0
      %254 = vmatprep.subr.bf16.mxu0 0
      %255 = vmatpush1.bf16.msra.mxu0 0
      %256 = vmatprep.subr.bf16.mxu0 0
      %257 = vmatpush1.bf16.msra.mxu0 0
      %258 = vmatprep.subr.bf16.mxu0 0
      %259 = vmatpush1.bf16.msra.mxu0 %v243
      %260 = vmatprep.subr.bf16.mxu0 0
      %261 = vmatpush1.bf16.msra.mxu0 %v242
      %262 = vmatprep.subr.bf16.mxu0 0
      %263 = vmatpush2.bf16.msra.mxu0 0
      %264 = vmatprep.subr.bf16.mxu0 0
      %265 = vmatpush2.bf16.msra.mxu0 0
      %266 = vmatprep.subr.bf16.mxu0 0
      %267 = vmatpush2.bf16.msra.mxu0 0
      %268 = vmatprep.subr.bf16.mxu0 0
      %269 = vmatpush2.bf16.msra.mxu0 0
      %270 = vmatprep.subr.bf16.mxu0 0
      %271 = vmatpush2.bf16.msra.mxu0 0
      %272 = vmatprep.subr.bf16.mxu0 0
      %273 = vmatpush2.bf16.msra.mxu0 0
      %274 = vmatprep.subr.bf16.mxu0 0
      %275 = vmatpush2.bf16.msra.mxu0 0
      %276 = vmatprep.subr.bf16.mxu0 0
      %277 = vmatpush2.bf16.msra.mxu0 0
      %278 = vmatprep.mubr.bf16.mxu0 0
      %279 = vmatmul.mubr.bf16.gmra.mxu0 %v60
      %v280 = vpop.f32.mrf.mxu0
      %v281 = vadd.f32 %v233, %v280
      %v282 = vpop.f32.mrf.mxu0
      %v283 = vpop.f32.mrf.mxu0
      %v284 = vpop.f32.mrf.mxu0
      %285 = vdwg.mxu0
      %v286 = vadd.f32 %v228, %v281
      %v287 = vxor.u32 %v286, 2147483648
      %v288 = vmul.f32 %v287, 1.442695
      %v289 = vpow.pop %v288
      %v290 = vadd.f32 %v289, 1.0
      %v291 = vrcp.pop %v290
      %v292 = vmul.f32 1.0, %v291
      %v295 = vunpack.c.l.s4 1983009808
      %v296 = vunpack.c.0.s8 %v295
      %v297 = vlaneseq
      %v298 = vshrl.u32 %v297, 7
      %v299 = vsub.s32 %v296, %v298
      %v300 = vrot.slane %v281, %v299
      %301 = vrot.lane.b32.xlu0 %v300, 64
      %v302 = vpop.permute.xlu0 %301
      %v304 = vmul.f32 %v292, %v302
      %306 = vrot.lane.b32.xlu0 %v304, 64
      %v307 = vpop.permute.xlu0 %306
      %v309 = vadd.f32 %v228, %v307
      %v310 = vtanh.pop %v309
      %v311 = vsub.f32 1.0, %v292
      %313 = vrot.lane.b32.xlu0 %v310, 96
      %v314 = vpop.permute.xlu0 %313
      %v316 = vmul.f32 %v311, %v314
      %v319 = vunpack.c.l.s4 857870592
      %v320 = vunpack.c.0.s8 %v319
      %v321 = vlaneseq
      %v322 = vshrl.u32 %v321, 7
      %v323 = vsub.s32 %v320, %v322
      %v324 = vrot.slane %v55, %v323
      %325 = vrot.lane.b32.xlu0 %v324, 32
      %v326 = vpop.permute.xlu0 %325
      %v328 = vmul.f32 %v292, %v326
      %v329 = vadd.f32 %v316, %v328
      %v331 = vlaneseq
      %v332 = vshrl.u32 %v331, 7
      %v333 = vsub.s32 0, %v332
      %v334 = vrot.slane %v329, %v333
      %335 = vrot.lane.b32.xlu0 %v334, 96
      %v336 = vpop.permute.xlu0 %335
      %vm338 = vcmask 253952
      %339 = vst.msk [vmem:[#allocation8] sm:$0x1] %vm338, %v336
      %vm340 = vcmask 0
      %341 = vst.msk [vmem:[#allocation2] sm:$0x1] %vm340, -inf
      %342 = vst.msk [vmem:[#allocation3] sm:$0x1] %vm340, 0.0
    $region37: #{bahdanau_decoder_step.1} parent=1 // pred_fallthru
      _
    %v343 = vld [vmem:[#allocation8] sm:$0x1]
    %v344 = vpack.c.bf16 %v343, %v343
    %v345 = vld [vmem:[%s7] sm:$0xf]
    %v346 = vld [vmem:[%s7 + $0x4] sm:$0xf]
    %v347 = vld [vmem:[%s7 + $0x8] sm:$0xf]
    %v348 = vld [vmem:[%s7 + $0xc] sm:$0xf]
    %v349 = vld [vmem:[%s8] sm:$0x1]
    %v354 = vunpack.c.l.b16 %v345
    %v355 = vunpack.c.l.b16 %v346
    %v356 = vunpack.c.l.b16 %v347
    %v357 = vunpack.c.l.b16 %v348
    %v358 = vpack.c.b16 %v355, %v354
    %v359 = vpack.c.b16 %v357, %v356
    %vm362 = vcmask 261120
    %v364 = vsel %vm362, %v344, 0
    %366 = vmatprep.subr.bf16.mxu0 0
    %367 = vmatpush1.bf16.msra.mxu0 0
    %368 = vmatprep.subr.bf16.mxu0 0
    %369 = vmatpush1.bf16.msra.mxu0 0
    %370 = vmatprep.subr.bf16.mxu0 0
    %371 = vmatpush1.bf16.msra.mxu0 0
    %372 = vmatprep.subr.bf16.mxu0 0
    %373 = vmatpush1.bf16.msra.mxu0 0
    %374 = vmatprep.subr.bf16.mxu0 0
    %375 = vmatpush1.bf16.msra.mxu0 0
    %376 = vmatprep.subr.bf16.mxu0 0
    %377 = vmatpush1.bf16.msra.mxu0 0
    %378 = vmatprep.subr.bf16.mxu0 0
    %379 = vmatpush1.bf16.msra.mxu0 %v359
    %380 = vmatprep.subr.bf16.mxu0 0
    %381 = vmatpush1.bf16.msra.mxu0 %v358
    %382 = vmatprep.subr.bf16.mxu0 0
    %383 = vmatpush2.bf16.msra.mxu0 0
    %384 = vmatprep.subr.bf16.mxu0 0
    %385 = vmatpush2.bf16.msra.mxu0 0
    %386 = vmatprep.subr.bf16.mxu0 0
    %387 = vmatpush2.bf16.msra.mxu0 0
    %388 = vmatprep.subr.bf16.mxu0 0
    %389 = vmatpush2.bf16.msra.mxu0 0
    %390 = vmatprep.subr.bf16.mxu0 0
    %391 = vmatpush2.bf16.msra.mxu0 0
    %392 = vmatprep.subr.bf16.mxu0 0
    %393 = vmatpush2.bf16.msra.mxu0 0
    %394 = vmatprep.subr.bf16.mxu0 0
    %395 = vmatpush2.bf16.msra.mxu0 0
    %396 = vmatprep.subr.bf16.mxu0 0
    %397 = vmatpush2.bf16.msra.mxu0 0
    %398 = vmatprep.mubr.bf16.mxu0 0
    %399 = vmatmul.mubr.bf16.gmra.mxu0 %v364
    %v400 = vpop.f32.mrf.mxu0
    %v401 = vadd.f32 %v349, %v400
    %v402 = vpop.f32.mrf.mxu0
    %v403 = vpop.f32.mrf.mxu0
    %v404 = vpop.f32.mrf.mxu0
    %405 = vdwg.mxu0
    %s406 = smul.u32 0, 128
    %s407 = sshra.s32 %s406, 7
    %s408 = sand.u32 %s406, 127
    %s409 = scalar_lea.vmem [#allocation6], %s407
    %410 = vst [vmem:[%s409] sm:$0x1] %v401
    %v411 = vld [vmem:[#allocation2] sm:$0x1]
    %vm412 = vcmask 1040384
    %v413 = vsel %vm412, %v401, -inf
    %414 = vmax.xlane.f32.xlu0 %v413
    %v415 = vpop.xlane.xlu0 %414
    %v416 = vmax.f32 %v411, %v415
    %v417 = vld [vmem:[#allocation3] sm:$0x1]
    %v418 = vsub.f32 %v411, %v416
    %v419 = vmul.f32 %v418, 1.442695
    %v420 = vpow.pop %v419
    %v421 = vmul.f32 %v417, %v420
    %423 = vset.pattern.permute.xlu0 0
    %424 = vperm.xlu0 %423, %v416
    %v425 = vpop.permute.xlu0 %424
    %v427 = vlaneseq
    %v428 = vshrl.u32 %v427, 7
    %v429 = vsub.s32 0, %v428
    %v430 = vrot.slane %v425, %v429
    %v431 = vsub.f32 %v401, %v430
    %v432 = vmul.f32 %v431, 1.442695
    %v433 = vpow.pop %v432
    %v434 = vsel %vm412, %v433, 0.0
    %435 = vadd.xlane.f32.xlu0 %v434
    %v436 = vpop.xlane.xlu0 %435
    %v437 = vadd.f32 %v421, %v436
    %vm438 = vcmask 0
    %439 = vst.msk [vmem:[#allocation3] sm:$0x1] %vm438, %v437
    %440 = vst.msk [vmem:[#allocation2] sm:$0x1] %vm438, %v416
    // Predicated region
    $region38: #{bahdanau_decoder_step.1} parent=1 // pred_check
      %p441 = pneg %p51
    $region39: #{bahdanau_decoder_step.1} parent=1 // pred_check_branch
      %443 = sbr.rel (%p441) target = $region41
    $region40: #{bahdanau_decoder_step.1} parent=1 // pred_region
      %v444 = vld [vmem:[#allocation2] sm:$0x1]
      %v445 = vld [vmem:[#allocation3] sm:$0x1]
      %v446 = vlog2.pop %v445
      %v447 = vmul.f32 %v446, 0.6931472
      %v448 = vadd.f32 %v444, %v447
      %v449 = vld [vmem:[#allocation6] sm:$0x1]
      %451 = vset.pattern.permute.xlu0 0
      %452 = vperm.xlu0 %451, %v448
      %v453 = vpop.permute.xlu0 %452
      %v455 = vlaneseq
      %v456 = vshrl.u32 %v455, 7
      %v457 = vsub.s32 0, %v456
      %v458 = vrot.slane %v453, %v457
      %v459 = vsub.f32 %v449, %v458
      %460 = vst [vmem:[#allocation6] sm:$0x1] %v459
    $region41: #{bahdanau_decoder_step.1} parent=1 // pred_fallthru
      _
    // Predicated region
    $region42: #{bahdanau_decoder_step.1} parent=1 // pred_check
      _
    $region43: #{bahdanau_decoder_step.1} parent=1 // pred_check_branch
      %462 = sbr.rel (0) target = $region45
    $region44: #{bahdanau_decoder_step.1} parent=1 // pred_region
      %s464 = ssub.s32 16, 16
      %465 = vsyncadd [#allocation7], %s464
      %s467 = sshll.u32 [#allocation6], 4
      %s468 = int_to_ptr.vmem [resolvable:$true] %s467
      %470 = dma.vmem_to_hbm [thread:$0]  %s468, 16, %s9, [#allocation7]
    $region45: #{bahdanau_decoder_step.1} parent=1 // pred_fallthru
      _
    // Predicated region
    $region46: #{bahdanau_decoder_step.1} parent=1 // pred_check
      _
    $region47: #{bahdanau_decoder_step.1} parent=1 // pred_check_branch
      %472 = sbr.rel (0) target = $region49
    $region48: #{bahdanau_decoder_step.1} parent=1 // pred_region
      %s474 = ssub.s32 16, 16
      %475 = vsyncadd [#allocation9], %s474
      %s477 = sshll.u32 [#allocation8], 4
      %s478 = int_to_ptr.vmem [resolvable:$true] %s477
      %480 = dma.vmem_to_hbm [thread:$0]  %s478, 16, %s10, [#allocation9]
    $region49: #{bahdanau_decoder_step.1} parent=1 // pred_fallthru
      _
    // Predicated region
    $region50: #{bahdanau_decoder_step.1} parent=1 // pred_check
      _
    $region51: #{bahdanau_decoder_step.1} parent=1 // pred_check_branch
      %482 = sbr.rel (0) target = $region53
    $region52: #{bahdanau_decoder_step.1} parent=1 // pred_region
      %s484 = ssub.s32 16, 16
      %485 = vsyncadd [#allocation9], %s484
      %s487 = sshll.u32 [#allocation10], 4
      %s488 = int_to_ptr.vmem [resolvable:$true] %s487
      %490 = dma.vmem_to_hbm [thread:$0]  %s488, 16, %s11, [#allocation9]
    $region53: #{bahdanau_decoder_step.1} parent=1 // pred_fallthru
      _
    // Predicated region
    $region54: #{bahdanau_decoder_step.1} parent=1 // pred_check
      _
    $region55: #{bahdanau_decoder_step.1} parent=1 // pred_check_branch
      %492 = sbr.rel (0) target = $region57
    $region56: #{bahdanau_decoder_step.1} parent=1 // pred_region
      %493 = dma.done [#allocation7], 16
    $region57: #{bahdanau_decoder_step.1} parent=1 // pred_fallthru
      _
    // Predicated region
    $region58: #{bahdanau_decoder_step.1} parent=1 // pred_check
      _
    $region59: #{bahdanau_decoder_step.1} parent=1 // pred_check_branch
      %495 = sbr.rel (0) target = $region61
    $region60: #{bahdanau_decoder_step.1} parent=1 // pred_region
      %496 = dma.done [#allocation9], 16
    $region61: #{bahdanau_decoder_step.1} parent=1 // pred_fallthru
      _
    // Predicated region
    $region62: #{bahdanau_decoder_step.1} parent=1 // pred_check
      _
    $region63: #{bahdanau_decoder_step.1} parent=1 // pred_check_branch
      %498 = sbr.rel (0) target = $region65
    $region64: #{bahdanau_decoder_step.1} parent=1 // pred_region
      %499 = dma.done [#allocation9], 16
    $region65: #{bahdanau_decoder_step.1} parent=1 // pred_fallthru
      _
    %500 = vsyncpa [#allocation7], 1
    %501 = vsyncpa [#allocation9], 1

</llo_original>
